<compile_context>
chip_gen: v5e
topology: v5e:2x2
jax: 0.10.0
libtpu: 0.0.40
codegen_flags: <defaults>
</compile_context>

<pallas_src>
import functools

import jax
import jax.numpy as jnp
from jax.experimental import pallas as pl
from jax.experimental.pallas import tpu as pltpu


def _conv3x3_reflect(x_flat, w_ref, b_ref, xpv_ref, patch_ref, w_first, w_last,
                     H, W):
    """Reflection-padded 3x3 conv on a (C, H*W) activation, entirely in VMEM.

    x_flat   : (C, H*W) float32 value, row-major flattened spatial (lane = H*W)
    w_ref    : (C_out, 9*C_in) weights, column index = (ki*3 + kj)*C_in + c_in
    b_ref    : (C_out, 1) bias
    xpv_ref  : (C, (H+4)*W) f32 scratch: [junk row | H+2 padded rows | junk row]
    patch_ref: (9*C, H*W) f32 scratch: im2col patch matrix
    w_first / w_last : (C, H*W) bool lane masks for w == 0 / w == W-1
    """
    C = x_flat.shape[0]
    P = H * W
    OFF = W  # one junk margin row in front so the +/-1 shifted slices stay in bounds

    # ---- vertical reflection padding (pure row copies in the flattened layout) ----
    xpv_ref[:, OFF + W: OFF + (H + 1) * W] = x_flat                         # rows 0..H-1
    xpv_ref[:, OFF: OFF + W] = x_flat[:, W: 2 * W]                          # row -1 -> row 1
    xpv_ref[:, OFF + (H + 1) * W: OFF + (H + 2) * W] = (
        x_flat[:, (H - 2) * W: (H - 1) * W])                                # row H  -> row H-2

    # ---- im2col patch matrix: 9 taps, horizontal reflection via lane masks ----
    for ki in range(3):
        base = OFF + ki * W
        center = xpv_ref[:, base: base + P]              # source column w
        plus = xpv_ref[:, base + 1: base + 1 + P]        # source column w+1
        minus = xpv_ref[:, base - 1: base - 1 + P]       # source column w-1
        left = jnp.where(w_first, plus, minus)           # kj=0: col w-1, reflect at w=0
        right = jnp.where(w_last, minus, plus)           # kj=2: col w+1, reflect at w=W-1
        patch_ref[(ki * 3 + 0) * C: (ki * 3 + 1) * C, :] = left
        patch_ref[(ki * 3 + 1) * C: (ki * 3 + 2) * C, :] = center
        patch_ref[(ki * 3 + 2) * C: (ki * 3 + 3) * C, :] = right

    # ---- one big-K matmul on the MXU + bias (lane-dense output (C, H*W)) ----
    y = jnp.dot(w_ref[...].astype(jnp.float32), patch_ref[...],
                preferred_element_type=jnp.float32)      # (C, H*W)
    return y + b_ref[...].astype(jnp.float32)


def _resnet_block_kernel(x_ref, w1_ref, b1_ref, w2_ref, b2_ref, o_ref,
                         xpv_ref, patch_ref, *, H, W):
    """Fused: out = x + conv2(reflect_pad(conv1(reflect_pad(x)))) for one batch element."""
    C = x_ref.shape[1]
    P = H * W

    x = x_ref[0].astype(jnp.float32)                      # (C, H*W); residual stays on chip

    lane = jax.lax.broadcasted_iota(jnp.int32, (C, P), 1)
    w_pos = lane % W
    w_first = w_pos == 0
    w_last = w_pos == W - 1

    h = _conv3x3_reflect(x, w1_ref, b1_ref, xpv_ref, patch_ref, w_first, w_last, H, W)
    y = _conv3x3_reflect(h, w2_ref, b2_ref, xpv_ref, patch_ref, w_first, w_last, H, W)

    o_ref[0] = (x + y).astype(o_ref.dtype)                # fused residual add


def resnet_block_forward(x_nchw, params):
    """out = x + conv2(reflect_pad(conv1(reflect_pad(x)))), matching the PyTorch module.

    params = (w1, b1, w2, b2) with w: (C, 9*C) (see _torch_weight_to_mat), b: (C, 1).
    """
    w1, b1, w2, b2 = params
    B, C, H, W = x_nchw.shape
    P = H * W

    x_flat = x_nchw.reshape(B, C, P)   # free contiguous reshape, no transpose

    # TODO(synk): for large images / v7x's 64 MiB VMEM, tile the grid over row strips
    # (2-row halo for the fused 5x5 receptive field) instead of one whole image per
    # grid step; that also gives >B pipeline steps at small batch.
    out_flat = pl.pallas_call(
        functools.partial(_resnet_block_kernel, H=H, W=W),
        out_shape=jax.ShapeDtypeStruct((B, C, P), x_nchw.dtype),
        grid_spec=pltpu.PrefetchScalarGridSpec(
            num_scalar_prefetch=0,
            grid=(B,),
            in_specs=[
                pl.BlockSpec((1, C, P), lambda b: (b, 0, 0)),
                pl.BlockSpec((C, 9 * C), lambda b: (0, 0)),
                pl.BlockSpec((C, 1), lambda b: (0, 0)),
                pl.BlockSpec((C, 9 * C), lambda b: (0, 0)),
                pl.BlockSpec((C, 1), lambda b: (0, 0)),
            ],
            out_specs=pl.BlockSpec((1, C, P), lambda b: (b, 0, 0)),
            scratch_shapes=[
                pltpu.VMEM((C, (H + 4) * W), jnp.float32),   # padded image (+ margins)
                pltpu.VMEM((9 * C, P), jnp.float32),         # im2col patches
            ],
        ),
        compiler_params=pltpu.CompilerParams(
            dimension_semantics=("parallel",)),
    )(x_flat, w1, b1, w2, b2)

    return out_flat.reshape(B, C, H, W)


def _torch_weight_to_mat(w_oihw):
    """(C_out, C_in, 3, 3) -> (C_out, 9*C_in), column index = (ki*3+kj)*C_in + c_in."""
    c_out, c_in = w_oihw.shape[0], w_oihw.shape[1]
    return jnp.transpose(w_oihw, (0, 2, 3, 1)).reshape(c_out, 9 * c_in)


def _reference_forward(x_nchw, params_oihw):
    """Pure-JAX reference using lax conv (NCHW, reflection pad)."""
    (w1, b1), (w2, b2) = params_oihw

    def conv(x, w, b):
        xp = jnp.pad(x, ((0, 0), (0, 0), (1, 1), (1, 1)), mode="reflect")
        y = jax.lax.conv_general_dilated(
            xp, w, window_strides=(1, 1), padding="VALID",
            dimension_numbers=("NCHW", "OIHW", "NCHW"))
        return y + b[None, :, None, None]

    return x_nchw + conv(conv(x_nchw, w1, b1), w2, b2)


if __name__ == "__main__":
    B, C, H, W = 2, 4, 16, 16

    key = jax.random.PRNGKey(0)
    kx, kw1, kb1, kw2, kb2 = jax.random.split(key, 5)

    x = jax.random.normal(kx, (B, C, H, W), dtype=jnp.float32)

    # Conv2d(C, C, 3) weights in PyTorch OIHW layout.
    w1_oihw = jax.random.normal(kw1, (C, C, 3, 3), dtype=jnp.float32) * 0.1
    b1 = jax.random.normal(kb1, (C,), dtype=jnp.float32) * 0.1
    w2_oihw = jax.random.normal(kw2, (C, C, 3, 3), dtype=jnp.float32) * 0.1
    b2 = jax.random.normal(kb2, (C,), dtype=jnp.float32) * 0.1

    params = (
        _torch_weight_to_mat(w1_oihw), b1.reshape(C, 1),
        _torch_weight_to_mat(w2_oihw), b2.reshape(C, 1),
    )

    fwd = jax.jit(resnet_block_forward)
    out = fwd(x, params)
    out = jax.block_until_ready(out)

    ref = _reference_forward(x, ((w1_oihw, b1), (w2_oihw, b2)))
    assert out.shape == (B, C, H, W)
    assert jnp.allclose(out, ref, atol=1e-4, rtol=1e-4), "mismatch vs reference"

    print("KERNEL_OK")
</pallas_src>

<mosaic_0001>
module attributes {stable_mosaic.version = 11 : i64} {
  func.func @_resnet_block_kernel(%arg0: i32, %arg1: memref<1x4x256xf32, #tpu.memory_space<vmem>>, %arg2: memref<4x36xf32, #tpu.memory_space<vmem>>, %arg3: memref<4x1xf32, #tpu.memory_space<vmem>>, %arg4: memref<4x36xf32, #tpu.memory_space<vmem>>, %arg5: memref<4x1xf32, #tpu.memory_space<vmem>>, %arg6: memref<1x4x256xf32, #tpu.memory_space<vmem>>, %arg7: memref<4x320xf32, #tpu.memory_space<vmem>>, %arg8: memref<36x256xf32, #tpu.memory_space<vmem>>) attributes {dimension_semantics = [#tpu.dimension_semantics<parallel>], iteration_bounds = array<i64: 2>, scalar_prefetch = 0 : i64, scratch_operands = 2 : i64, tpu.core_type = #tpu.core_type<tc>, window_params = [{transform_indices = @transform_0, window_bounds = array<i64: 1, 4, 256>}, {pipeline_mode = #tpu.pipeline_mode<synchronous>, transform_indices = @transform_1, window_bounds = array<i64: 4, 36>}, {pipeline_mode = #tpu.pipeline_mode<synchronous>, transform_indices = @transform_2, window_bounds = array<i64: 4, 1>}, {pipeline_mode = #tpu.pipeline_mode<synchronous>, transform_indices = @transform_3, window_bounds = array<i64: 4, 36>}, {pipeline_mode = #tpu.pipeline_mode<synchronous>, transform_indices = @transform_4, window_bounds = array<i64: 4, 1>}, {transform_indices = @transform_5, window_bounds = array<i64: 1, 4, 256>}]} {
    %c0 = arith.constant 0 : index
    %c0_0 = arith.constant 0 : index
    %c0_1 = arith.constant 0 : index
    %0 = vector.load %arg1[%c0, %c0_0, %c0_1] : memref<1x4x256xf32, #tpu.memory_space<vmem>>, vector<1x4x256xf32>
    %1 = vector.shape_cast %0 : vector<1x4x256xf32> to vector<4x256xf32>
    %2 = tpu.iota {dimensions = array<i32: 1>} : vector<4x256xi32>
    %c16_i32 = arith.constant 16 : i32
    %c0_i32 = arith.constant 0 : i32
    %3 = arith.cmpi eq, %c16_i32, %c0_i32 : i32
    %c1_i32 = arith.constant 1 : i32
    %4 = arith.select %3, %c1_i32, %c16_i32 : i32
    %5 = vector.broadcast %4 : i32 to vector<4x256xi32>
    %6 = arith.remsi %2, %5 : vector<4x256xi32>
    %c0_i32_2 = arith.constant 0 : i32
    %7 = vector.broadcast %c0_i32_2 : i32 to vector<4x256xi32>
    %8 = arith.cmpi ne, %6, %7 : vector<4x256xi32>
    %c0_i32_3 = arith.constant 0 : i32
    %9 = vector.broadcast %c0_i32_3 : i32 to vector<4x256xi32>
    %10 = arith.cmpi slt, %6, %9 : vector<4x256xi32>
    %c0_i32_4 = arith.constant 0 : i32
    %11 = arith.cmpi slt, %4, %c0_i32_4 : i32
    %12 = vector.broadcast %11 : i1 to vector<4x256xi1>
    %13 = vector.broadcast %12 : vector<4x256xi1> to vector<4x256xi1>
    %14 = arith.xori %10, %13 : vector<4x256xi1>
    %15 = arith.andi %14, %8 : vector<4x256xi1>
    %16 = vector.broadcast %4 : i32 to vector<4x256xi32>
    %17 = arith.addi %6, %16 : vector<4x256xi32>
    %18 = arith.select %15, %17, %6 : vector<4x256xi1>, vector<4x256xi32>
    %c0_i32_5 = arith.constant 0 : i32
    %19 = vector.broadcast %c0_i32_5 : i32 to vector<4x256xi32>
    %20 = arith.cmpi eq, %18, %19 : vector<4x256xi32>
    %c15_i32 = arith.constant 15 : i32
    %21 = vector.broadcast %c15_i32 : i32 to vector<4x256xi32>
    %22 = arith.cmpi eq, %18, %21 : vector<4x256xi32>
    %c0_6 = arith.constant 0 : index
    %c32 = arith.constant 32 : index
    %23 = vector.load %arg7[%c0_6, %c32] : memref<4x320xf32, #tpu.memory_space<vmem>>, vector<4x256xf32>
    tpu.vector_store %arg7[%c0_6, %c32], %1 {strides = array<i32>} : memref<4x320xf32, #tpu.memory_space<vmem>>, vector<4x256xf32>,
    %24 = vector.extract_strided_slice %1 {offsets = [0, 16], sizes = [4, 16], strides = [1, 1]} : vector<4x256xf32> to vector<4x16xf32>
    %c0_7 = arith.constant 0 : index
    %c16 = arith.constant 16 : index
    %25 = vector.load %arg7[%c0_7, %c16] : memref<4x320xf32, #tpu.memory_space<vmem>>, vector<4x16xf32>
    tpu.vector_store %arg7[%c0_7, %c16], %24 {strides = array<i32>} : memref<4x320xf32, #tpu.memory_space<vmem>>, vector<4x16xf32>,
    %26 = vector.extract_strided_slice %1 {offsets = [0, 224], sizes = [4, 16], strides = [1, 1]} : vector<4x256xf32> to vector<4x16xf32>
    %c0_8 = arith.constant 0 : index
    %c288 = arith.constant 288 : index
    %27 = vector.load %arg7[%c0_8, %c288] : memref<4x320xf32, #tpu.memory_space<vmem>>, vector<4x16xf32>
    tpu.vector_store %arg7[%c0_8, %c288], %26 {strides = array<i32>} : memref<4x320xf32, #tpu.memory_space<vmem>>, vector<4x16xf32>,
    %c0_9 = arith.constant 0 : index
    %c16_10 = arith.constant 16 : index
    %28 = vector.load %arg7[%c0_9, %c16_10] : memref<4x320xf32, #tpu.memory_space<vmem>>, vector<4x256xf32>
    %c0_11 = arith.constant 0 : index
    %c17 = arith.constant 17 : index
    %29 = vector.load %arg7[%c0_11, %c17] : memref<4x320xf32, #tpu.memory_space<vmem>>, vector<4x256xf32>
    %c0_12 = arith.constant 0 : index
    %c15 = arith.constant 15 : index
    %30 = vector.load %arg7[%c0_12, %c15] : memref<4x320xf32, #tpu.memory_space<vmem>>, vector<4x256xf32>
    %31 = arith.select %20, %29, %30 : vector<4x256xi1>, vector<4x256xf32>
    %32 = arith.select %22, %30, %29 : vector<4x256xi1>, vector<4x256xf32>
    %c0_13 = arith.constant 0 : index
    %c0_14 = arith.constant 0 : index
    %33 = vector.load %arg8[%c0_13, %c0_14] : memref<36x256xf32, #tpu.memory_space<vmem>>, vector<4x256xf32>
    tpu.vector_store %arg8[%c0_13, %c0_14], %31 {strides = array<i32>} : memref<36x256xf32, #tpu.memory_space<vmem>>, vector<4x256xf32>,
    %c4 = arith.constant 4 : index
    %c0_15 = arith.constant 0 : index
    %34 = vector.load %arg8[%c4, %c0_15] : memref<36x256xf32, #tpu.memory_space<vmem>>, vector<4x256xf32>
    tpu.vector_store %arg8[%c4, %c0_15], %28 {strides = array<i32>} : memref<36x256xf32, #tpu.memory_space<vmem>>, vector<4x256xf32>,
    %c8 = arith.constant 8 : index
    %c0_16 = arith.constant 0 : index
    %35 = vector.load %arg8[%c8, %c0_16] : memref<36x256xf32, #tpu.memory_space<vmem>>, vector<4x256xf32>
    tpu.vector_store %arg8[%c8, %c0_16], %32 {strides = array<i32>} : memref<36x256xf32, #tpu.memory_space<vmem>>, vector<4x256xf32>,
    %c0_17 = arith.constant 0 : index
    %c32_18 = arith.constant 32 : index
    %36 = vector.load %arg7[%c0_17, %c32_18] : memref<4x320xf32, #tpu.memory_space<vmem>>, vector<4x256xf32>
    %c0_19 = arith.constant 0 : index
    %c33 = arith.constant 33 : index
    %37 = vector.load %arg7[%c0_19, %c33] : memref<4x320xf32, #tpu.memory_space<vmem>>, vector<4x256xf32>
    %c0_20 = arith.constant 0 : index
    %c31 = arith.constant 31 : index
    %38 = vector.load %arg7[%c0_20, %c31] : memref<4x320xf32, #tpu.memory_space<vmem>>, vector<4x256xf32>
    %39 = arith.select %20, %37, %38 : vector<4x256xi1>, vector<4x256xf32>
    %40 = arith.select %22, %38, %37 : vector<4x256xi1>, vector<4x256xf32>
    %c12 = arith.constant 12 : index
    %c0_21 = arith.constant 0 : index
    %41 = vector.load %arg8[%c12, %c0_21] : memref<36x256xf32, #tpu.memory_space<vmem>>, vector<4x256xf32>
    tpu.vector_store %arg8[%c12, %c0_21], %39 {strides = array<i32>} : memref<36x256xf32, #tpu.memory_space<vmem>>, vector<4x256xf32>,
    %c16_22 = arith.constant 16 : index
    %c0_23 = arith.constant 0 : index
    %42 = vector.load %arg8[%c16_22, %c0_23] : memref<36x256xf32, #tpu.memory_space<vmem>>, vector<4x256xf32>
    tpu.vector_store %arg8[%c16_22, %c0_23], %36 {strides = array<i32>} : memref<36x256xf32, #tpu.memory_space<vmem>>, vector<4x256xf32>,
    %c20 = arith.constant 20 : index
    %c0_24 = arith.constant 0 : index
    %43 = vector.load %arg8[%c20, %c0_24] : memref<36x256xf32, #tpu.memory_space<vmem>>, vector<4x256xf32>
    tpu.vector_store %arg8[%c20, %c0_24], %40 {strides = array<i32>} : memref<36x256xf32, #tpu.memory_space<vmem>>, vector<4x256xf32>,
    %c0_25 = arith.constant 0 : index
    %c48 = arith.constant 48 : index
    %44 = vector.load %arg7[%c0_25, %c48] : memref<4x320xf32, #tpu.memory_space<vmem>>, vector<4x256xf32>
    %c0_26 = arith.constant 0 : index
    %c49 = arith.constant 49 : index
    %45 = vector.load %arg7[%c0_26, %c49] : memref<4x320xf32, #tpu.memory_space<vmem>>, vector<4x256xf32>
    %c0_27 = arith.constant 0 : index
    %c47 = arith.constant 47 : index
    %46 = vector.load %arg7[%c0_27, %c47] : memref<4x320xf32, #tpu.memory_space<vmem>>, vector<4x256xf32>
    %47 = arith.select %20, %45, %46 : vector<4x256xi1>, vector<4x256xf32>
    %48 = arith.select %22, %46, %45 : vector<4x256xi1>, vector<4x256xf32>
    %c24 = arith.constant 24 : index
    %c0_28 = arith.constant 0 : index
    %49 = vector.load %arg8[%c24, %c0_28] : memref<36x256xf32, #tpu.memory_space<vmem>>, vector<4x256xf32>
    tpu.vector_store %arg8[%c24, %c0_28], %47 {strides = array<i32>} : memref<36x256xf32, #tpu.memory_space<vmem>>, vector<4x256xf32>,
    %c28 = arith.constant 28 : index
    %c0_29 = arith.constant 0 : index
    %50 = vector.load %arg8[%c28, %c0_29] : memref<36x256xf32, #tpu.memory_space<vmem>>, vector<4x256xf32>
    tpu.vector_store %arg8[%c28, %c0_29], %44 {strides = array<i32>} : memref<36x256xf32, #tpu.memory_space<vmem>>, vector<4x256xf32>,
    %c32_30 = arith.constant 32 : index
    %c0_31 = arith.constant 0 : index
    %51 = vector.load %arg8[%c32_30, %c0_31] : memref<36x256xf32, #tpu.memory_space<vmem>>, vector<4x256xf32>
    tpu.vector_store %arg8[%c32_30, %c0_31], %48 {strides = array<i32>} : memref<36x256xf32, #tpu.memory_space<vmem>>, vector<4x256xf32>,
    %c0_32 = arith.constant 0 : index
    %c0_33 = arith.constant 0 : index
    %52 = vector.load %arg2[%c0_32, %c0_33] : memref<4x36xf32, #tpu.memory_space<vmem>>, vector<4x36xf32>
    %c0_34 = arith.constant 0 : index
    %c0_35 = arith.constant 0 : index
    %53 = vector.load %arg8[%c0_34, %c0_35] : memref<36x256xf32, #tpu.memory_space<vmem>>, vector<36x256xf32>
    %cst = arith.constant dense<0.000000e+00> : vector<4x256xf32>
    %54 = tpu.matmul %52, %53, %cst {dimension_numbers = #tpu.dot_dimension_numbers<[1], [0], [0], [1], [0, 0, 1, 1], [], []>} : vector<4x36xf32>, vector<36x256xf32>, vector<4x256xf32> -> vector<4x256xf32>
    %c0_36 = arith.constant 0 : index
    %c0_37 = arith.constant 0 : index
    %55 = vector.load %arg3[%c0_36, %c0_37] : memref<4x1xf32, #tpu.memory_space<vmem>>, vector<4x1xf32>
    %56 = vector.broadcast %55 : vector<4x1xf32> to vector<4x256xf32>
    %57 = arith.addf %54, %56 : vector<4x256xf32>
    %c0_38 = arith.constant 0 : index
    %c32_39 = arith.constant 32 : index
    %58 = vector.load %arg7[%c0_38, %c32_39] : memref<4x320xf32, #tpu.memory_space<vmem>>, vector<4x256xf32>
    tpu.vector_store %arg7[%c0_38, %c32_39], %57 {strides = array<i32>} : memref<4x320xf32, #tpu.memory_space<vmem>>, vector<4x256xf32>,
    %59 = vector.extract_strided_slice %57 {offsets = [0, 16], sizes = [4, 16], strides = [1, 1]} : vector<4x256xf32> to vector<4x16xf32>
    %c0_40 = arith.constant 0 : index
    %c16_41 = arith.constant 16 : index
    %60 = vector.load %arg7[%c0_40, %c16_41] : memref<4x320xf32, #tpu.memory_space<vmem>>, vector<4x16xf32>
    tpu.vector_store %arg7[%c0_40, %c16_41], %59 {strides = array<i32>} : memref<4x320xf32, #tpu.memory_space<vmem>>, vector<4x16xf32>,
    %61 = vector.extract_strided_slice %57 {offsets = [0, 224], sizes = [4, 16], strides = [1, 1]} : vector<4x256xf32> to vector<4x16xf32>
    %c0_42 = arith.constant 0 : index
    %c288_43 = arith.constant 288 : index
    %62 = vector.load %arg7[%c0_42, %c288_43] : memref<4x320xf32, #tpu.memory_space<vmem>>, vector<4x16xf32>
    tpu.vector_store %arg7[%c0_42, %c288_43], %61 {strides = array<i32>} : memref<4x320xf32, #tpu.memory_space<vmem>>, vector<4x16xf32>,
    %c0_44 = arith.constant 0 : index
    %c16_45 = arith.constant 16 : index
    %63 = vector.load %arg7[%c0_44, %c16_45] : memref<4x320xf32, #tpu.memory_space<vmem>>, vector<4x256xf32>
    %c0_46 = arith.constant 0 : index
    %c17_47 = arith.constant 17 : index
    %64 = vector.load %arg7[%c0_46, %c17_47] : memref<4x320xf32, #tpu.memory_space<vmem>>, vector<4x256xf32>
    %c0_48 = arith.constant 0 : index
    %c15_49 = arith.constant 15 : index
    %65 = vector.load %arg7[%c0_48, %c15_49] : memref<4x320xf32, #tpu.memory_space<vmem>>, vector<4x256xf32>
    %66 = arith.select %20, %64, %65 : vector<4x256xi1>, vector<4x256xf32>
    %67 = arith.select %22, %65, %64 : vector<4x256xi1>, vector<4x256xf32>
    %c0_50 = arith.constant 0 : index
    %c0_51 = arith.constant 0 : index
    %68 = vector.load %arg8[%c0_50, %c0_51] : memref<36x256xf32, #tpu.memory_space<vmem>>, vector<4x256xf32>
    tpu.vector_store %arg8[%c0_50, %c0_51], %66 {strides = array<i32>} : memref<36x256xf32, #tpu.memory_space<vmem>>, vector<4x256xf32>,
    %c4_52 = arith.constant 4 : index
    %c0_53 = arith.constant 0 : index
    %69 = vector.load %arg8[%c4_52, %c0_53] : memref<36x256xf32, #tpu.memory_space<vmem>>, vector<4x256xf32>
    tpu.vector_store %arg8[%c4_52, %c0_53], %63 {strides = array<i32>} : memref<36x256xf32, #tpu.memory_space<vmem>>, vector<4x256xf32>,
    %c8_54 = arith.constant 8 : index
    %c0_55 = arith.constant 0 : index
    %70 = vector.load %arg8[%c8_54, %c0_55] : memref<36x256xf32, #tpu.memory_space<vmem>>, vector<4x256xf32>
    tpu.vector_store %arg8[%c8_54, %c0_55], %67 {strides = array<i32>} : memref<36x256xf32, #tpu.memory_space<vmem>>, vector<4x256xf32>,
    %c0_56 = arith.constant 0 : index
    %c32_57 = arith.constant 32 : index
    %71 = vector.load %arg7[%c0_56, %c32_57] : memref<4x320xf32, #tpu.memory_space<vmem>>, vector<4x256xf32>
    %c0_58 = arith.constant 0 : index
    %c33_59 = arith.constant 33 : index
    %72 = vector.load %arg7[%c0_58, %c33_59] : memref<4x320xf32, #tpu.memory_space<vmem>>, vector<4x256xf32>
    %c0_60 = arith.constant 0 : index
    %c31_61 = arith.constant 31 : index
    %73 = vector.load %arg7[%c0_60, %c31_61] : memref<4x320xf32, #tpu.memory_space<vmem>>, vector<4x256xf32>
    %74 = arith.select %20, %72, %73 : vector<4x256xi1>, vector<4x256xf32>
    %75 = arith.select %22, %73, %72 : vector<4x256xi1>, vector<4x256xf32>
    %c12_62 = arith.constant 12 : index
    %c0_63 = arith.constant 0 : index
    %76 = vector.load %arg8[%c12_62, %c0_63] : memref<36x256xf32, #tpu.memory_space<vmem>>, vector<4x256xf32>
    tpu.vector_store %arg8[%c12_62, %c0_63], %74 {strides = array<i32>} : memref<36x256xf32, #tpu.memory_space<vmem>>, vector<4x256xf32>,
    %c16_64 = arith.constant 16 : index
    %c0_65 = arith.constant 0 : index
    %77 = vector.load %arg8[%c16_64, %c0_65] : memref<36x256xf32, #tpu.memory_space<vmem>>, vector<4x256xf32>
    tpu.vector_store %arg8[%c16_64, %c0_65], %71 {strides = array<i32>} : memref<36x256xf32, #tpu.memory_space<vmem>>, vector<4x256xf32>,
    %c20_66 = arith.constant 20 : index
    %c0_67 = arith.constant 0 : index
    %78 = vector.load %arg8[%c20_66, %c0_67] : memref<36x256xf32, #tpu.memory_space<vmem>>, vector<4x256xf32>
    tpu.vector_store %arg8[%c20_66, %c0_67], %75 {strides = array<i32>} : memref<36x256xf32, #tpu.memory_space<vmem>>, vector<4x256xf32>,
    %c0_68 = arith.constant 0 : index
    %c48_69 = arith.constant 48 : index
    %79 = vector.load %arg7[%c0_68, %c48_69] : memref<4x320xf32, #tpu.memory_space<vmem>>, vector<4x256xf32>
    %c0_70 = arith.constant 0 : index
    %c49_71 = arith.constant 49 : index
    %80 = vector.load %arg7[%c0_70, %c49_71] : memref<4x320xf32, #tpu.memory_space<vmem>>, vector<4x256xf32>
    %c0_72 = arith.constant 0 : index
    %c47_73 = arith.constant 47 : index
    %81 = vector.load %arg7[%c0_72, %c47_73] : memref<4x320xf32, #tpu.memory_space<vmem>>, vector<4x256xf32>
    %82 = arith.select %20, %80, %81 : vector<4x256xi1>, vector<4x256xf32>
    %83 = arith.select %22, %81, %80 : vector<4x256xi1>, vector<4x256xf32>
    %c24_74 = arith.constant 24 : index
    %c0_75 = arith.constant 0 : index
    %84 = vector.load %arg8[%c24_74, %c0_75] : memref<36x256xf32, #tpu.memory_space<vmem>>, vector<4x256xf32>
    tpu.vector_store %arg8[%c24_74, %c0_75], %82 {strides = array<i32>} : memref<36x256xf32, #tpu.memory_space<vmem>>, vector<4x256xf32>,
    %c28_76 = arith.constant 28 : index
    %c0_77 = arith.constant 0 : index
    %85 = vector.load %arg8[%c28_76, %c0_77] : memref<36x256xf32, #tpu.memory_space<vmem>>, vector<4x256xf32>
    tpu.vector_store %arg8[%c28_76, %c0_77], %79 {strides = array<i32>} : memref<36x256xf32, #tpu.memory_space<vmem>>, vector<4x256xf32>,
    %c32_78 = arith.constant 32 : index
    %c0_79 = arith.constant 0 : index
    %86 = vector.load %arg8[%c32_78, %c0_79] : memref<36x256xf32, #tpu.memory_space<vmem>>, vector<4x256xf32>
    tpu.vector_store %arg8[%c32_78, %c0_79], %83 {strides = array<i32>} : memref<36x256xf32, #tpu.memory_space<vmem>>, vector<4x256xf32>,
    %c0_80 = arith.constant 0 : index
    %c0_81 = arith.constant 0 : index
    %87 = vector.load %arg4[%c0_80, %c0_81] : memref<4x36xf32, #tpu.memory_space<vmem>>, vector<4x36xf32>
    %c0_82 = arith.constant 0 : index
    %c0_83 = arith.constant 0 : index
    %88 = vector.load %arg8[%c0_82, %c0_83] : memref<36x256xf32, #tpu.memory_space<vmem>>, vector<36x256xf32>
    %cst_84 = arith.constant dense<0.000000e+00> : vector<4x256xf32>
    %89 = tpu.matmul %87, %88, %cst_84 {dimension_numbers = #tpu.dot_dimension_numbers<[1], [0], [0], [1], [0, 0, 1, 1], [], []>} : vector<4x36xf32>, vector<36x256xf32>, vector<4x256xf32> -> vector<4x256xf32>
    %c0_85 = arith.constant 0 : index
    %c0_86 = arith.constant 0 : index
    %90 = vector.load %arg5[%c0_85, %c0_86] : memref<4x1xf32, #tpu.memory_space<vmem>>, vector<4x1xf32>
    %91 = vector.broadcast %90 : vector<4x1xf32> to vector<4x256xf32>
    %92 = arith.addf %89, %91 : vector<4x256xf32>
    %93 = arith.addf %1, %92 : vector<4x256xf32>
    %c0_87 = arith.constant 0 : index
    %c0_88 = arith.constant 0 : index
    %c0_89 = arith.constant 0 : index
    %94 = vector.load %arg6[%c0_87, %c0_88, %c0_89] : memref<1x4x256xf32, #tpu.memory_space<vmem>>, vector<1x4x256xf32>
    %95 = vector.shape_cast %94 : vector<1x4x256xf32> to vector<4x256xf32>
    %96 = vector.shape_cast %93 : vector<4x256xf32> to vector<1x4x256xf32>
    tpu.vector_store %arg6[%c0_87, %c0_88, %c0_89], %96 {strides = array<i32>} : memref<1x4x256xf32, #tpu.memory_space<vmem>>, vector<1x4x256xf32>,
    return
  }
  func.func @transform_0(%arg0: i32) -> (i32, i32, i32) {
    %c0_i32 = arith.constant 0 : i32
    %c0_i32_0 = arith.constant 0 : i32
    %c0_i32_1 = arith.constant 0 : i32
    return %arg0, %c0_i32, %c0_i32_0 : i32, i32, i32
  }
  func.func @transform_1(%arg0: i32) -> (i32, i32) {
    %c0_i32 = arith.constant 0 : i32
    %c0_i32_0 = arith.constant 0 : i32
    %c0_i32_1 = arith.constant 0 : i32
    return %c0_i32, %c0_i32_0 : i32, i32
  }
  func.func @transform_2(%arg0: i32) -> (i32, i32) {
    %c0_i32 = arith.constant 0 : i32
    %c0_i32_0 = arith.constant 0 : i32
    %c0_i32_1 = arith.constant 0 : i32
    return %c0_i32, %c0_i32_0 : i32, i32
  }
  func.func @transform_3(%arg0: i32) -> (i32, i32) {
    %c0_i32 = arith.constant 0 : i32
    %c0_i32_0 = arith.constant 0 : i32
    %c0_i32_1 = arith.constant 0 : i32
    return %c0_i32, %c0_i32_0 : i32, i32
  }
  func.func @transform_4(%arg0: i32) -> (i32, i32) {
    %c0_i32 = arith.constant 0 : i32
    %c0_i32_0 = arith.constant 0 : i32
    %c0_i32_1 = arith.constant 0 : i32
    return %c0_i32, %c0_i32_0 : i32, i32
  }
  func.func @transform_5(%arg0: i32) -> (i32, i32, i32) {
    %c0_i32 = arith.constant 0 : i32
    %c0_i32_0 = arith.constant 0 : i32
    %c0_i32_1 = arith.constant 0 : i32
    return %arg0, %c0_i32, %c0_i32_0 : i32, i32, i32
  }
}

</mosaic_0001>

<llo_original>
// kernel: resnet_block_forward.1
$region0: #{resnet_block_forward.1}
  #allocation0 [shape = 'u32[]', space=smem, size = 0x4, offset = 0x4, fixed_abs, tag = 'smem constant byte address 0x4 - core index']
  #allocation1 [shape = 'u32[72,128]{1,0:T(1,128)}', space=vmem, size = 0x9000, scoped, tag = 'internal scratch']
  #allocation2 [shape = 'f32[4,320]{1,0:T(4,128)}', space=vmem, size = 0x1800, scoped, tag = 'scratch operand']
  #allocation3 [shape = 'f32[36,256]{1,0:T(8,128)}', space=vmem, size = 0xa000, scoped, tag = 'scratch operand']
  %s0 = inlined_call_operand.vmem [shape: f32[2,4,256], index: 0, kind: input, shape index: {}]
  %s1 = inlined_call_operand.vmem [shape: f32[4,36], index: 1, kind: input, shape index: {}]
  %s2 = inlined_call_operand.vmem [shape: f32[4,1], index: 2, kind: input, shape index: {}]
  %s3 = inlined_call_operand.vmem [shape: f32[4,36], index: 3, kind: input, shape index: {}]
  %s4 = inlined_call_operand.vmem [shape: f32[4,1], index: 4, kind: input, shape index: {}]
  %s5 = inlined_call_operand.vmem [shape: f32[2,4,256], index: 5, kind: output, shape index: {}]
  %s6 = sld [smem:[#allocation0]]
  $region53: #{resnet_block_forward.1} parent=0
    _
  %s8 = ssub.s32 1, %s6
  %s9 = scalar_select 0, %s8, %s6
  loop: start=0, step=1, limit=4
  $region2: #{resnet_block_forward.1} parent=0 // loop_pre_header
    _
  $region3: #{resnet_block_forward.1} parent=0 // loop_header
    %s11 = sphi 0, %s15
    %p12 = scmp.ge.s32.totalorder %s11, 4
    %s21 = sphi 0, %s23
    %s24 = sphi 0, %s21
    %s25 = sphi 0, %s24
    %s41 = sphi 0, %s25
    %s45 = sphi 0, %s45
    %s47 = sphi 0, %s45
    %s48 = sphi 0, %s47
    %s62 = sphi 0, %s48
    %s66 = sphi 0, %s66
    %s68 = sphi 0, %s66
    %s69 = sphi 0, %s68
    %s83 = sphi 0, %s69
    %s87 = sphi 0, %s87
    %s89 = sphi 0, %s87
    %s90 = sphi 0, %s89
    %s104 = sphi 0, %s90
    %s108 = sphi 0, %s108
    %s110 = sphi 0, %s108
    %s111 = sphi 0, %s110
    %s125 = sphi 0, %s111
    %s131 = sphi 0, %s133
    %s134 = sphi 0, %s131
    %s135 = sphi 0, %s134
    %s151 = sphi 0, %s135
  $region4: #{resnet_block_forward.1} parent=0 // loop_header_branch
    %14 = sbr.rel (%p12) target = $region8
  $region5: #{resnet_block_forward.1} parent=0 // loop_body
    %s16 = ssub.s32 %s11, 1
    %s17 = ssub.s32 %s11, 2
    %s18 = sadd.s32 %s11, 1
    %s19 = ssub.s32 %s11, %s18
    %p20 = scmp.eq.s32.totalorder %s19, 0
    %s22 = sadd.s32 %s21, 1
    %s23 = scalar_select %p20, %s21, %s22
    %p26 = pneg %p20
    %p27 = scmp.eq.s32.totalorder %s11, 1
    %p28 = por %p26, %p27
    %p29 = scmp.ne.s32.totalorder %s21, %s24
    %p30 = scmp.eq.s32.totalorder %s11, 0
    %p31 = por %p29, %p30
    %p32 = scmp.ne.s32.totalorder %s21, %s24
    %p33 = scmp.eq.s32.totalorder %s16, 1
    %p34 = por %p32, %p33
    %p35 = scmp.ne.s32.totalorder %s24, %s25
    %p36 = scmp.eq.s32.totalorder %s16, 0
    %p37 = por %p35, %p36
    %p38 = scmp.ne.s32.totalorder %s24, %s25
    %p39 = scmp.eq.s32.totalorder %s17, 1
    %p40 = por %p38, %p39
    %p42 = scmp.ne.s32.totalorder %s25, %s41
    %p43 = scmp.eq.s32.totalorder %s17, 0
    %p44 = por %p42, %p43
    %s46 = sadd.s32 %s45, 1
    %p49 = scmp.eq.s32.totalorder %s11, 1
    %p50 = scmp.ne.s32.totalorder %s45, %s47
    %p51 = scmp.eq.s32.totalorder %s11, 0
    %p52 = por %p50, %p51
    %p53 = scmp.ne.s32.totalorder %s45, %s47
    %p54 = scmp.eq.s32.totalorder %s16, 1
    %p55 = por %p53, %p54
    %p56 = scmp.ne.s32.totalorder %s47, %s48
    %p57 = scmp.eq.s32.totalorder %s16, 0
    %p58 = por %p56, %p57
    %p59 = scmp.ne.s32.totalorder %s47, %s48
    %p60 = scmp.eq.s32.totalorder %s17, 1
    %p61 = por %p59, %p60
    %p63 = scmp.ne.s32.totalorder %s48, %s62
    %p64 = scmp.eq.s32.totalorder %s17, 0
    %p65 = por %p63, %p64
    %s67 = sadd.s32 %s66, 1
    %p70 = scmp.eq.s32.totalorder %s11, 1
    %p71 = scmp.ne.s32.totalorder %s66, %s68
    %p72 = scmp.eq.s32.totalorder %s11, 0
    %p73 = por %p71, %p72
    %p74 = scmp.ne.s32.totalorder %s66, %s68
    %p75 = scmp.eq.s32.totalorder %s16, 1
    %p76 = por %p74, %p75
    %p77 = scmp.ne.s32.totalorder %s68, %s69
    %p78 = scmp.eq.s32.totalorder %s16, 0
    %p79 = por %p77, %p78
    %p80 = scmp.ne.s32.totalorder %s68, %s69
    %p81 = scmp.eq.s32.totalorder %s17, 1
    %p82 = por %p80, %p81
    %p84 = scmp.ne.s32.totalorder %s69, %s83
    %p85 = scmp.eq.s32.totalorder %s17, 0
    %p86 = por %p84, %p85
    %s88 = sadd.s32 %s87, 1
    %p91 = scmp.eq.s32.totalorder %s11, 1
    %p92 = scmp.ne.s32.totalorder %s87, %s89
    %p93 = scmp.eq.s32.totalorder %s11, 0
    %p94 = por %p92, %p93
    %p95 = scmp.ne.s32.totalorder %s87, %s89
    %p96 = scmp.eq.s32.totalorder %s16, 1
    %p97 = por %p95, %p96
    %p98 = scmp.ne.s32.totalorder %s89, %s90
    %p99 = scmp.eq.s32.totalorder %s16, 0
    %p100 = por %p98, %p99
    %p101 = scmp.ne.s32.totalorder %s89, %s90
    %p102 = scmp.eq.s32.totalorder %s17, 1
    %p103 = por %p101, %p102
    %p105 = scmp.ne.s32.totalorder %s90, %s104
    %p106 = scmp.eq.s32.totalorder %s17, 0
    %p107 = por %p105, %p106
    %s109 = sadd.s32 %s108, 1
    %p112 = scmp.eq.s32.totalorder %s11, 1
    %p113 = scmp.ne.s32.totalorder %s108, %s110
    %p114 = scmp.eq.s32.totalorder %s11, 0
    %p115 = por %p113, %p114
    %p116 = scmp.ne.s32.totalorder %s108, %s110
    %p117 = scmp.eq.s32.totalorder %s16, 1
    %p118 = por %p116, %p117
    %p119 = scmp.ne.s32.totalorder %s110, %s111
    %p120 = scmp.eq.s32.totalorder %s16, 0
    %p121 = por %p119, %p120
    %p122 = scmp.ne.s32.totalorder %s110, %s111
    %p123 = scmp.eq.s32.totalorder %s17, 1
    %p124 = por %p122, %p123
    %p126 = scmp.ne.s32.totalorder %s111, %s125
    %p127 = scmp.eq.s32.totalorder %s17, 0
    %p128 = por %p126, %p127
    %s129 = ssub.s32 %s11, %s18
    %p130 = scmp.eq.s32.totalorder %s129, 0
    %s132 = sadd.s32 %s131, 1
    %s133 = scalar_select %p130, %s131, %s132
    %p136 = pneg %p130
    %p137 = scmp.eq.s32.totalorder %s11, 1
    %p138 = por %p136, %p137
    %p139 = scmp.ne.s32.totalorder %s131, %s134
    %p140 = scmp.eq.s32.totalorder %s11, 0
    %p141 = por %p139, %p140
    %p142 = scmp.ne.s32.totalorder %s131, %s134
    %p143 = scmp.eq.s32.totalorder %s16, 1
    %p144 = por %p142, %p143
    %p145 = scmp.ne.s32.totalorder %s134, %s135
    %p146 = scmp.eq.s32.totalorder %s16, 0
    %p147 = por %p145, %p146
    %p148 = scmp.ne.s32.totalorder %s134, %s135
    %p149 = scmp.eq.s32.totalorder %s17, 1
    %p150 = por %p148, %p149
    %p152 = scmp.ne.s32.totalorder %s135, %s151
    %p153 = scmp.eq.s32.totalorder %s17, 0
    %p154 = por %p152, %p153
    %p155 = scmp.le.s32.totalorder 1, %s11
    %p156 = scmp.lt.s32.totalorder %s11, 3
    %p157 = pnand %p155, %p156
    %p158 = pneg %p157
    // Predicated region
    $region9: #{resnet_block_forward.1} parent=5 // pred_check
      _
    $region10: #{resnet_block_forward.1} parent=5 // pred_check_branch
      %160 = sbr.rel (%p157) target = $region12
    $region11: #{resnet_block_forward.1} parent=5 // pred_region
      %s161 = ssub.s32 %s11, 1
      // Predicated region
      $region13: #{resnet_block_forward.1} parent=11 // pred_check
        %p162 = pneg %p58
      $region14: #{resnet_block_forward.1} parent=11 // pred_check_branch
        %164 = sbr.rel (%p162) target = $region16
      $region15: #{resnet_block_forward.1} parent=11 // pred_region
        _
      $region16: #{resnet_block_forward.1} parent=11 // pred_fallthru
        _
      // Predicated region
      $region17: #{resnet_block_forward.1} parent=11 // pred_check
        %p165 = pneg %p79
      $region18: #{resnet_block_forward.1} parent=11 // pred_check_branch
        %167 = sbr.rel (%p165) target = $region20
      $region19: #{resnet_block_forward.1} parent=11 // pred_region
        _
      $region20: #{resnet_block_forward.1} parent=11 // pred_fallthru
        _
      // Predicated region
      $region21: #{resnet_block_forward.1} parent=11 // pred_check
        %p168 = pneg %p100
      $region22: #{resnet_block_forward.1} parent=11 // pred_check_branch
        %170 = sbr.rel (%p168) target = $region24
      $region23: #{resnet_block_forward.1} parent=11 // pred_region
        _
      $region24: #{resnet_block_forward.1} parent=11 // pred_fallthru
        _
      // Predicated region
      $region25: #{resnet_block_forward.1} parent=11 // pred_check
        %p171 = pneg %p121
      $region26: #{resnet_block_forward.1} parent=11 // pred_check_branch
        %173 = sbr.rel (%p171) target = $region28
      $region27: #{resnet_block_forward.1} parent=11 // pred_region
        _
      $region28: #{resnet_block_forward.1} parent=11 // pred_fallthru
        _
    $region12: #{resnet_block_forward.1} parent=5 // pred_fallthru
      _
    %p174 = scmp.lt.s32.totalorder %s11, 2
    // Predicated region
    $region29: #{resnet_block_forward.1} parent=5 // pred_check
      %p175 = pneg %p174
    $region30: #{resnet_block_forward.1} parent=5 // pred_check_branch
      %177 = sbr.rel (%p175) target = $region32
    $region31: #{resnet_block_forward.1} parent=5 // pred_region
      // Predicated region
      $region33: #{resnet_block_forward.1} parent=31 // pred_check
        %p178 = pneg %p31
      $region34: #{resnet_block_forward.1} parent=31 // pred_check_branch
        %180 = sbr.rel (%p178) target = $region36
      $region35: #{resnet_block_forward.1} parent=31 // pred_region
        %p181 = scmp.lt.s32.totalorder %s11, 1
        %s182 = scalar_select %p181, %s11, 1
        %s183 = smul.addr %s182, 2
        %s184 = smul.addr %s183, 4
        %s185 = scalar_lea.vmem %s0, %s184
      $region36: #{resnet_block_forward.1} parent=31 // pred_fallthru
        _
    $region32: #{resnet_block_forward.1} parent=5 // pred_fallthru
      _
    %p186 = scmp.le.s32.totalorder 1, %s11
    %p187 = scmp.lt.s32.totalorder %s11, 3
    %p188 = pnand %p186, %p187
    %p189 = pneg %p188
    // Predicated region
    $region37: #{resnet_block_forward.1} parent=5 // pred_check
      _
    $region38: #{resnet_block_forward.1} parent=5 // pred_check_branch
      %191 = sbr.rel (%p188) target = $region40
    $region39: #{resnet_block_forward.1} parent=5 // pred_region
      %s192 = ssub.s32 %s11, 1
      %p193 = scmp.lt.s32.totalorder %s16, 1
      %s194 = scalar_select %p193, %s16, 1
      %s195 = smul.addr %s194, 2
      %s196 = smul.addr %s195, 4
      %s197 = scalar_lea.vmem %s0, %s196
      %p198 = pneg %p37
      %p199 = pneg %p34
      %p200 = pneg %p58
      %p201 = pneg %p55
      %p202 = pneg %p79
      %p203 = pneg %p76
      %p204 = pneg %p100
      %p205 = pneg %p97
      %p206 = pneg %p121
      %p207 = pneg %p118
      %p208 = pneg %p147
      %p209 = pneg %p144
      %p210 = scmp.lt.s32.totalorder %s16, 1
      %s211 = scalar_select %p210, %s16, 1
      %s212 = smul.addr %s211, 2
      %s213 = smul.addr %s212, 4
      %s214 = scalar_lea.vmem %s5, %s213
      %p215 = scmp.lt.s32.totalorder %s16, 1
      %s216 = scalar_select %p215, %s16, 1
      %s217 = smul.addr %s216, 2
      %s218 = smul.addr %s217, 4
      %s219 = scalar_lea.vmem %s0, %s218
      %p220 = scmp.lt.s32.totalorder %s16, 1
      %s221 = scalar_select %p220, %s16, 1
      %s222 = smul.addr %s221, 2
      %s223 = smul.addr %s222, 4
      %s224 = scalar_lea.vmem %s5, %s223
      %v225 = vld [vmem:[%s219] sm:$0xff]
      %v226 = vlaneseq
      %v227 = vand.u32 %v226, 127
      %v228 = vadd.s32 %v227, 128
      %vm229 = vcmp.lt.s32.totalorder %v227, 0
      %v230 = vsub.s32 0, %v227
      %v231 = vsel %vm229, %v230, %v227
      %v232 = vshrl.u32 %v231, 4
      %v233 = vand.u32 %v231, 15
      %v234 = vsub.s32 0, %v233
      %v235 = vsel %vm229, %v234, %v233
      %vm236 = vcmp.lt.s32.totalorder %v228, 0
      %v237 = vsub.s32 0, %v228
      %v238 = vsel %vm236, %v237, %v228
      %v239 = vshrl.u32 %v238, 4
      %v240 = vand.u32 %v238, 15
      %v241 = vsub.s32 0, %v240
      %v242 = vsel %vm236, %v241, %v240
      %vm243 = vcmp.ne.s32.totalorder %v235, 0
      %vm244 = vcmp.ne.s32.totalorder %v242, 0
      %vm245 = vcmp.lt.s32.totalorder %v235, 0
      %vm246 = vcmp.lt.s32.totalorder %v242, 0
      %vm247 = vmand %vm245, %vm243
      %vm248 = vmand %vm246, %vm244
      %v249 = vadd.s32 %v235, 16
      %v250 = vadd.s32 %v242, 16
      %v251 = vsel %vm247, %v249, %v235
      %v252 = vsel %vm248, %v250, %v242
      %vm253 = vcmp.eq.s32.totalorder %v251, 0
      %vm254 = vcmp.eq.s32.totalorder %v252, 0
      %vm255 = vcmp.eq.s32.totalorder %v251, 15
      %vm256 = vcmp.eq.s32.totalorder %v252, 15
      %258 = vrot.lane.b32.xlu0 %v225, 32
      %v259 = vpop.permute.xlu0 %258
      %v260 = vrot.slane %v259, 4
      %vm261 = vcmask 261120
      %v262 = vsel %vm261, %v260, %v259
      %vm265 = vcmask 1043712
      %vm266 = vcmask 1047556
      %vm267 = vmor %vm266, %vm265
      %268 = vst.msk [vmem:[#allocation2] sm:$0xff] %vm267, %v262
      %vm269 = vcmask 257024
      %270 = vst.msk [vmem:[#allocation2 + $0x8] sm:$0xf] %vm269, %v260
      %vm271 = vcmask 257152
      %272 = vst.msk [vmem:[#allocation2] sm:$0xf] %vm271, %v225
      %273 = vrot.lane.b32.xlu0 %v225, 64
      %v274 = vpop.permute.xlu0 %273
      %v275 = vrot.slane %v274, 4
      %vm277 = vcmask 388352
      %278 = vst.msk [vmem:[#allocation2 + $0x8] sm:$0xf] %vm277, %v275
      %v279 = vld [vmem:[#allocation2] sm:$0xff]
      %v280 = vld [vmem:[#allocation2 + $0x8] sm:$0xf]
      %283 = vst [vmem:[#allocation1] ss:$2 sm:$0xff] %v279
      %s284 = scalar_lea.vmem [#allocation1], 16
      %285 = vst [vmem:[%s284] ss:$2 sm:$0xff] %v280
      %v286 = vld.sshfl [vmem:[#allocation1] sm:$0xff pattern:$0x75316420]
      %v287 = vld.sshfl [vmem:[#allocation1 + $0x8] sm:$0xff pattern:$0x75316420]
      %v288 = vld.sshfl [vmem:[#allocation1 + $0x10] sm:$0xff pattern:$0x75316420]
      %289 = vrot.lane.b32.xlu0 %v286, 111
      %v290 = vpop.permute.xlu0 %289
      %291 = vrot.lane.b32.xlu0 %v287, 111
      %v292 = vpop.permute.xlu0 %291
      %293 = vrot.lane.b32.xlu0 %v288, 111
      %v294 = vpop.permute.xlu0 %293
      %vm295 = vcmask 908288
      %v296 = vsel %vm295, %v290, %v292
      %v297 = vsel %vm295, %v292, %v294
      %300 = vst [vmem:[#allocation1] ss:$2 sm:$0xff] %v279
      %s301 = scalar_lea.vmem [#allocation1], 16
      %302 = vst [vmem:[%s301] ss:$2 sm:$0xff] %v280
      %v303 = vld.sshfl [vmem:[#allocation1] sm:$0xff pattern:$0x75316420]
      %v304 = vld.sshfl [vmem:[#allocation1 + $0x8] sm:$0xff pattern:$0x75316420]
      %v305 = vld.sshfl [vmem:[#allocation1 + $0x10] sm:$0xff pattern:$0x75316420]
      %306 = vrot.lane.b32.xlu0 %v303, 113
      %v307 = vpop.permute.xlu0 %306
      %308 = vrot.lane.b32.xlu0 %v304, 113
      %v309 = vpop.permute.xlu0 %308
      %310 = vrot.lane.b32.xlu0 %v305, 113
      %v311 = vpop.permute.xlu0 %310
      %vm312 = vcmask 924672
      %v313 = vsel %vm312, %v307, %v309
      %v314 = vsel %vm312, %v309, %v311
      %v317 = vsel %vm253, %v296, %v313
      %v318 = vsel %vm254, %v297, %v314
      %319 = vst [vmem:[#allocation1] ss:$2 sm:$0xff] %v279
      %s320 = scalar_lea.vmem [#allocation1], 16
      %321 = vst [vmem:[%s320] ss:$2 sm:$0xff] %v280
      %v322 = vld.sshfl [vmem:[#allocation1] sm:$0xff pattern:$0x75316420]
      %v323 = vld.sshfl [vmem:[#allocation1 + $0x8] sm:$0xff pattern:$0x75316420]
      %v324 = vld.sshfl [vmem:[#allocation1 + $0x10] sm:$0xff pattern:$0x75316420]
      %325 = vrot.lane.b32.xlu0 %v322, 113
      %v326 = vpop.permute.xlu0 %325
      %327 = vrot.lane.b32.xlu0 %v323, 113
      %v328 = vpop.permute.xlu0 %327
      %329 = vrot.lane.b32.xlu0 %v324, 113
      %v330 = vpop.permute.xlu0 %329
      %v331 = vsel %vm312, %v326, %v328
      %v332 = vsel %vm312, %v328, %v330
      %335 = vst [vmem:[#allocation1] ss:$2 sm:$0xff] %v279
      %s336 = scalar_lea.vmem [#allocation1], 16
      %337 = vst [vmem:[%s336] ss:$2 sm:$0xff] %v280
      %v338 = vld.sshfl [vmem:[#allocation1] sm:$0xff pattern:$0x75316420]
      %v339 = vld.sshfl [vmem:[#allocation1 + $0x8] sm:$0xff pattern:$0x75316420]
      %v340 = vld.sshfl [vmem:[#allocation1 + $0x10] sm:$0xff pattern:$0x75316420]
      %341 = vrot.lane.b32.xlu0 %v338, 111
      %v342 = vpop.permute.xlu0 %341
      %343 = vrot.lane.b32.xlu0 %v339, 111
      %v344 = vpop.permute.xlu0 %343
      %345 = vrot.lane.b32.xlu0 %v340, 111
      %v346 = vpop.permute.xlu0 %345
      %v347 = vsel %vm295, %v342, %v344
      %v348 = vsel %vm295, %v344, %v346
      %v351 = vsel %vm255, %v331, %v347
      %v352 = vsel %vm256, %v332, %v348
      %353 = vst [vmem:[#allocation3] sm:$0xf] %v317
      %354 = vst [vmem:[#allocation3 + $0x8] sm:$0xf] %v318
      %s355 = scalar_lea.vmem [#allocation1], 1
      %356 = vst [vmem:[%s355] ss:$2 sm:$0xff] %v279
      %s357 = scalar_lea.vmem [#allocation1], 17
      %358 = vst [vmem:[%s357] ss:$2 sm:$0xff] %v280
      %v359 = vld.sshfl [vmem:[#allocation1] sm:$0xff pattern:$0x75316420]
      %v360 = vld.sshfl [vmem:[#allocation1 + $0x8] sm:$0xff pattern:$0x75316420]
      %v361 = vld.sshfl [vmem:[#allocation1 + $0x10] sm:$0xff pattern:$0x75316420]
      %362 = vrot.lane.b32.xlu0 %v359, 112
      %v363 = vpop.permute.xlu0 %362
      %364 = vrot.lane.b32.xlu0 %v360, 112
      %v365 = vpop.permute.xlu0 %364
      %366 = vrot.lane.b32.xlu0 %v361, 112
      %v367 = vpop.permute.xlu0 %366
      %vm368 = vcmask 916480
      %v369 = vsel %vm368, %v363, %v365
      %v370 = vsel %vm368, %v365, %v367
      %373 = vst [vmem:[#allocation3] sm:$0xf0] %v369
      %374 = vst [vmem:[#allocation3 + $0x8] sm:$0xf0] %v370
      %375 = vst [vmem:[#allocation3 + $0x10] sm:$0xf] %v351
      %376 = vst [vmem:[#allocation3 + $0x18] sm:$0xf] %v352
      %v377 = vld [vmem:[#allocation2] sm:$0xff]
      %v378 = vld [vmem:[#allocation2 + $0x8] sm:$0xf]
      %381 = vst [vmem:[#allocation1] ss:$2 sm:$0xff] %v377
      %s382 = scalar_lea.vmem [#allocation1], 16
      %383 = vst [vmem:[%s382] ss:$2 sm:$0xff] %v378
      %v384 = vld.sshfl [vmem:[#allocation1] sm:$0xff pattern:$0x75316420]
      %v385 = vld.sshfl [vmem:[#allocation1 + $0x8] sm:$0xff pattern:$0x75316420]
      %v386 = vld.sshfl [vmem:[#allocation1 + $0x10] sm:$0xff pattern:$0x75316420]
      %387 = vrot.lane.b32.xlu0 %v384, 95
      %v388 = vpop.permute.xlu0 %387
      %389 = vrot.lane.b32.xlu0 %v385, 95
      %v390 = vpop.permute.xlu0 %389
      %391 = vrot.lane.b32.xlu0 %v386, 95
      %v392 = vpop.permute.xlu0 %391
      %vm393 = vcmask 777216
      %v394 = vsel %vm393, %v388, %v390
      %v395 = vsel %vm393, %v390, %v392
      %398 = vst [vmem:[#allocation1] ss:$2 sm:$0xff] %v377
      %s399 = scalar_lea.vmem [#allocation1], 16
      %400 = vst [vmem:[%s399] ss:$2 sm:$0xff] %v378
      %v401 = vld.sshfl [vmem:[#allocation1] sm:$0xff pattern:$0x75316420]
      %v402 = vld.sshfl [vmem:[#allocation1 + $0x8] sm:$0xff pattern:$0x75316420]
      %v403 = vld.sshfl [vmem:[#allocation1 + $0x10] sm:$0xff pattern:$0x75316420]
      %404 = vrot.lane.b32.xlu0 %v401, 97
      %v405 = vpop.permute.xlu0 %404
      %406 = vrot.lane.b32.xlu0 %v402, 97
      %v407 = vpop.permute.xlu0 %406
      %408 = vrot.lane.b32.xlu0 %v403, 97
      %v409 = vpop.permute.xlu0 %408
      %vm410 = vcmask 793600
      %v411 = vsel %vm410, %v405, %v407
      %v412 = vsel %vm410, %v407, %v409
      %v415 = vsel %vm253, %v394, %v411
      %v416 = vsel %vm254, %v395, %v412
      %417 = vst [vmem:[#allocation1] ss:$2 sm:$0xff] %v377
      %s418 = scalar_lea.vmem [#allocation1], 16
      %419 = vst [vmem:[%s418] ss:$2 sm:$0xff] %v378
      %v420 = vld.sshfl [vmem:[#allocation1] sm:$0xff pattern:$0x75316420]
      %v421 = vld.sshfl [vmem:[#allocation1 + $0x8] sm:$0xff pattern:$0x75316420]
      %v422 = vld.sshfl [vmem:[#allocation1 + $0x10] sm:$0xff pattern:$0x75316420]
      %423 = vrot.lane.b32.xlu0 %v420, 97
      %v424 = vpop.permute.xlu0 %423
      %425 = vrot.lane.b32.xlu0 %v421, 97
      %v426 = vpop.permute.xlu0 %425
      %427 = vrot.lane.b32.xlu0 %v422, 97
      %v428 = vpop.permute.xlu0 %427
      %v429 = vsel %vm410, %v424, %v426
      %v430 = vsel %vm410, %v426, %v428
      %433 = vst [vmem:[#allocation1] ss:$2 sm:$0xff] %v377
      %s434 = scalar_lea.vmem [#allocation1], 16
      %435 = vst [vmem:[%s434] ss:$2 sm:$0xff] %v378
      %v436 = vld.sshfl [vmem:[#allocation1] sm:$0xff pattern:$0x75316420]
      %v437 = vld.sshfl [vmem:[#allocation1 + $0x8] sm:$0xff pattern:$0x75316420]
      %v438 = vld.sshfl [vmem:[#allocation1 + $0x10] sm:$0xff pattern:$0x75316420]
      %439 = vrot.lane.b32.xlu0 %v436, 95
      %v440 = vpop.permute.xlu0 %439
      %441 = vrot.lane.b32.xlu0 %v437, 95
      %v442 = vpop.permute.xlu0 %441
      %443 = vrot.lane.b32.xlu0 %v438, 95
      %v444 = vpop.permute.xlu0 %443
      %v445 = vsel %vm393, %v440, %v442
      %v446 = vsel %vm393, %v442, %v444
      %v449 = vsel %vm255, %v429, %v445
      %v450 = vsel %vm256, %v430, %v446
      %v453 = vrot.slane %v415, 4
      %v454 = vrot.slane %v416, 4
      %457 = vst [vmem:[#allocation3 + $0x10] sm:$0xf0] %v453
      %458 = vst [vmem:[#allocation3 + $0x18] sm:$0xf0] %v454
      %459 = vst [vmem:[#allocation1] ss:$2 sm:$0xff] %v377
      %s460 = scalar_lea.vmem [#allocation1], 16
      %461 = vst [vmem:[%s460] ss:$2 sm:$0xff] %v378
      %v462 = vld.sshfl [vmem:[#allocation1] sm:$0xff pattern:$0x75316420]
      %v463 = vld.sshfl [vmem:[#allocation1 + $0x8] sm:$0xff pattern:$0x75316420]
      %v464 = vld.sshfl [vmem:[#allocation1 + $0x10] sm:$0xff pattern:$0x75316420]
      %465 = vrot.lane.b32.xlu0 %v462, 96
      %v466 = vpop.permute.xlu0 %465
      %467 = vrot.lane.b32.xlu0 %v463, 96
      %v468 = vpop.permute.xlu0 %467
      %469 = vrot.lane.b32.xlu0 %v464, 96
      %v470 = vpop.permute.xlu0 %469
      %vm471 = vcmask 785408
      %v472 = vsel %vm471, %v466, %v468
      %v473 = vsel %vm471, %v468, %v470
      %476 = vst [vmem:[#allocation3 + $0x20] sm:$0xf] %v472
      %477 = vst [vmem:[#allocation3 + $0x28] sm:$0xf] %v473
      %v480 = vrot.slane %v449, 4
      %v481 = vrot.slane %v450, 4
      %484 = vst [vmem:[#allocation3 + $0x20] sm:$0xf0] %v480
      %485 = vst [vmem:[#allocation3 + $0x28] sm:$0xf0] %v481
      %v486 = vld [vmem:[#allocation2] sm:$0xff]
      %v487 = vld [vmem:[#allocation2 + $0x8] sm:$0xf]
      %490 = vst [vmem:[#allocation1] ss:$2 sm:$0xff] %v486
      %s491 = scalar_lea.vmem [#allocation1], 16
      %492 = vst [vmem:[%s491] ss:$2 sm:$0xff] %v487
      %v493 = vld.sshfl [vmem:[#allocation1] sm:$0xff pattern:$0x75316420]
      %v494 = vld.sshfl [vmem:[#allocation1 + $0x8] sm:$0xff pattern:$0x75316420]
      %v495 = vld.sshfl [vmem:[#allocation1 + $0x10] sm:$0xff pattern:$0x75316420]
      %496 = vrot.lane.b32.xlu0 %v493, 79
      %v497 = vpop.permute.xlu0 %496
      %498 = vrot.lane.b32.xlu0 %v494, 79
      %v499 = vpop.permute.xlu0 %498
      %500 = vrot.lane.b32.xlu0 %v495, 79
      %v501 = vpop.permute.xlu0 %500
      %vm502 = vcmask 646144
      %v503 = vsel %vm502, %v497, %v499
      %v504 = vsel %vm502, %v499, %v501
      %507 = vst [vmem:[#allocation1] ss:$2 sm:$0xff] %v486
      %s508 = scalar_lea.vmem [#allocation1], 16
      %509 = vst [vmem:[%s508] ss:$2 sm:$0xff] %v487
      %v510 = vld.sshfl [vmem:[#allocation1] sm:$0xff pattern:$0x75316420]
      %v511 = vld.sshfl [vmem:[#allocation1 + $0x8] sm:$0xff pattern:$0x75316420]
      %v512 = vld.sshfl [vmem:[#allocation1 + $0x10] sm:$0xff pattern:$0x75316420]
      %513 = vrot.lane.b32.xlu0 %v510, 81
      %v514 = vpop.permute.xlu0 %513
      %515 = vrot.lane.b32.xlu0 %v511, 81
      %v516 = vpop.permute.xlu0 %515
      %517 = vrot.lane.b32.xlu0 %v512, 81
      %v518 = vpop.permute.xlu0 %517
      %vm519 = vcmask 662528
      %v520 = vsel %vm519, %v514, %v516
      %v521 = vsel %vm519, %v516, %v518
      %v524 = vsel %vm253, %v503, %v520
      %v525 = vsel %vm254, %v504, %v521
      %526 = vst [vmem:[#allocation1] ss:$2 sm:$0xff] %v486
      %s527 = scalar_lea.vmem [#allocation1], 16
      %528 = vst [vmem:[%s527] ss:$2 sm:$0xff] %v487
      %v529 = vld.sshfl [vmem:[#allocation1] sm:$0xff pattern:$0x75316420]
      %v530 = vld.sshfl [vmem:[#allocation1 + $0x8] sm:$0xff pattern:$0x75316420]
      %v531 = vld.sshfl [vmem:[#allocation1 + $0x10] sm:$0xff pattern:$0x75316420]
      %532 = vrot.lane.b32.xlu0 %v529, 81
      %v533 = vpop.permute.xlu0 %532
      %534 = vrot.lane.b32.xlu0 %v530, 81
      %v535 = vpop.permute.xlu0 %534
      %536 = vrot.lane.b32.xlu0 %v531, 81
      %v537 = vpop.permute.xlu0 %536
      %v538 = vsel %vm519, %v533, %v535
      %v539 = vsel %vm519, %v535, %v537
      %542 = vst [vmem:[#allocation1] ss:$2 sm:$0xff] %v486
      %s543 = scalar_lea.vmem [#allocation1], 16
      %544 = vst [vmem:[%s543] ss:$2 sm:$0xff] %v487
      %v545 = vld.sshfl [vmem:[#allocation1] sm:$0xff pattern:$0x75316420]
      %v546 = vld.sshfl [vmem:[#allocation1 + $0x8] sm:$0xff pattern:$0x75316420]
      %v547 = vld.sshfl [vmem:[#allocation1 + $0x10] sm:$0xff pattern:$0x75316420]
      %548 = vrot.lane.b32.xlu0 %v545, 79
      %v549 = vpop.permute.xlu0 %548
      %550 = vrot.lane.b32.xlu0 %v546, 79
      %v551 = vpop.permute.xlu0 %550
      %552 = vrot.lane.b32.xlu0 %v547, 79
      %v553 = vpop.permute.xlu0 %552
      %v554 = vsel %vm502, %v549, %v551
      %v555 = vsel %vm502, %v551, %v553
      %v558 = vsel %vm255, %v538, %v554
      %v559 = vsel %vm256, %v539, %v555
      %560 = vst [vmem:[#allocation3 + $0x30] sm:$0xf] %v524
      %561 = vst [vmem:[#allocation3 + $0x38] sm:$0xf] %v525
      %s562 = scalar_lea.vmem [#allocation1], 1
      %563 = vst [vmem:[%s562] ss:$2 sm:$0xff] %v486
      %s564 = scalar_lea.vmem [#allocation1], 17
      %565 = vst [vmem:[%s564] ss:$2 sm:$0xff] %v487
      %v566 = vld.sshfl [vmem:[#allocation1] sm:$0xff pattern:$0x75316420]
      %v567 = vld.sshfl [vmem:[#allocation1 + $0x8] sm:$0xff pattern:$0x75316420]
      %v568 = vld.sshfl [vmem:[#allocation1 + $0x10] sm:$0xff pattern:$0x75316420]
      %569 = vrot.lane.b32.xlu0 %v566, 80
      %v570 = vpop.permute.xlu0 %569
      %571 = vrot.lane.b32.xlu0 %v567, 80
      %v572 = vpop.permute.xlu0 %571
      %573 = vrot.lane.b32.xlu0 %v568, 80
      %v574 = vpop.permute.xlu0 %573
      %vm575 = vcmask 654336
      %v576 = vsel %vm575, %v570, %v572
      %v577 = vsel %vm575, %v572, %v574
      %580 = vst [vmem:[#allocation3 + $0x30] sm:$0xf0] %v576
      %581 = vst [vmem:[#allocation3 + $0x38] sm:$0xf0] %v577
      %582 = vst [vmem:[#allocation3 + $0x40] sm:$0xf] %v558
      %583 = vst [vmem:[#allocation3 + $0x48] sm:$0xf] %v559
      %v584 = vld [vmem:[%s1] sm:$0xf]
      %v585 = vld [vmem:[#allocation3] sm:$0xff]
      %v586 = vld [vmem:[#allocation3 + $0x8] sm:$0xff]
      %v587 = vld [vmem:[#allocation3 + $0x10] sm:$0xff]
      %v588 = vld [vmem:[#allocation3 + $0x18] sm:$0xff]
      %v589 = vld [vmem:[#allocation3 + $0x20] sm:$0xff]
      %v590 = vld [vmem:[#allocation3 + $0x28] sm:$0xff]
      %v591 = vld [vmem:[#allocation3 + $0x30] sm:$0xff]
      %v592 = vld [vmem:[#allocation3 + $0x38] sm:$0xff]
      %v593 = vld [vmem:[#allocation3 + $0x40] sm:$0xf]
      %v594 = vld [vmem:[#allocation3 + $0x48] sm:$0xf]
      %v595 = vld [vmem:[%s2] sm:$0xf]
      %597 = vset.pattern.permute.xlu0 0
      %598 = vperm.xlu0 %597, %v595
      %v599 = vpop.permute.xlu0 %598
      %vm601 = vcmask 293888
      %v603 = vsel %vm601, %v584, 0
      %vm605 = vcmask 1043456
      %v607 = vsel %vm605, %v593, 0
      %v610 = vsel %vm605, %v594, 0
      %612 = vmatpush.msra.mxu0 0.0
      %613 = vmatpush.msra.mxu0 0.0
      %614 = vmatpush.msra.mxu0 0.0
      %615 = vmatpush.msra.mxu0 0.0
      %616 = vmatpush.msra.mxu0 0.0
      %617 = vmatpush.msra.mxu0 0.0
      %618 = vmatpush.msra.mxu0 0.0
      %619 = vmatpush.msra.mxu0 0.0
      %620 = vmatpush.msra.mxu0 0.0
      %621 = vmatpush.msra.mxu0 0.0
      %622 = vmatpush.msra.mxu0 0.0
      %623 = vmatpush.msra.mxu0 %v607
      %624 = vmatpush.msra.mxu0 %v591
      %625 = vmatpush.msra.mxu0 %v589
      %626 = vmatpush.msra.mxu0 %v587
      %627 = vmatpush.msra.mxu0 %v585
      %628 = vmatmul.f32.gmra.mxu0 %v603
      %v629 = vpop.f32.mrf.mxu0
      %v630 = vadd.f32 %v599, %v629
      %631 = vdwg.mxu0
      %632 = vmatpush.msra.mxu0 0.0
      %633 = vmatpush.msra.mxu0 0.0
      %634 = vmatpush.msra.mxu0 0.0
      %635 = vmatpush.msra.mxu0 0.0
      %636 = vmatpush.msra.mxu0 0.0
      %637 = vmatpush.msra.mxu0 0.0
      %638 = vmatpush.msra.mxu0 0.0
      %639 = vmatpush.msra.mxu0 0.0
      %640 = vmatpush.msra.mxu0 0.0
      %641 = vmatpush.msra.mxu0 0.0
      %642 = vmatpush.msra.mxu0 0.0
      %643 = vmatpush.msra.mxu0 %v610
      %644 = vmatpush.msra.mxu0 %v592
      %645 = vmatpush.msra.mxu0 %v590
      %646 = vmatpush.msra.mxu0 %v588
      %647 = vmatpush.msra.mxu0 %v586
      %648 = vmatmul.f32.gmra.mxu0 %v603
      %v649 = vpop.f32.mrf.mxu0
      %v650 = vadd.f32 %v599, %v649
      %651 = vdwg.mxu0
      %v654 = vrot.slane %v650, 4
      %v655 = vsel %vm605, %v630, %v654
      %656 = vrot.lane.b32.xlu0 %v655, 32
      %v657 = vpop.permute.xlu0 %656
      %v658 = vrot.slane %v657, 4
      %v659 = vsel %vm261, %v658, %v657
      %662 = vst.msk [vmem:[#allocation2] sm:$0xff] %vm267, %v659
      %663 = vst.msk [vmem:[#allocation2 + $0x8] sm:$0xf] %vm269, %v658
      %664 = vst.msk [vmem:[#allocation2] sm:$0xf] %vm271, %v630
      %665 = vrot.lane.b32.xlu0 %v650, 64
      %v666 = vpop.permute.xlu0 %665
      %668 = vst.msk [vmem:[#allocation2 + $0x8] sm:$0xf] %vm277, %v666
      %v669 = vld [vmem:[#allocation2] sm:$0xff]
      %v670 = vld [vmem:[#allocation2 + $0x8] sm:$0xf]
      %673 = vst [vmem:[#allocation1] ss:$2 sm:$0xff] %v669
      %s674 = scalar_lea.vmem [#allocation1], 16
      %675 = vst [vmem:[%s674] ss:$2 sm:$0xff] %v670
      %v676 = vld.sshfl [vmem:[#allocation1] sm:$0xff pattern:$0x75316420]
      %v677 = vld.sshfl [vmem:[#allocation1 + $0x8] sm:$0xff pattern:$0x75316420]
      %v678 = vld.sshfl [vmem:[#allocation1 + $0x10] sm:$0xff pattern:$0x75316420]
      %679 = vrot.lane.b32.xlu0 %v676, 111
      %v680 = vpop.permute.xlu0 %679
      %681 = vrot.lane.b32.xlu0 %v677, 111
      %v682 = vpop.permute.xlu0 %681
      %683 = vrot.lane.b32.xlu0 %v678, 111
      %v684 = vpop.permute.xlu0 %683
      %v685 = vsel %vm295, %v680, %v682
      %v686 = vsel %vm295, %v682, %v684
      %689 = vst [vmem:[#allocation1] ss:$2 sm:$0xff] %v669
      %s690 = scalar_lea.vmem [#allocation1], 16
      %691 = vst [vmem:[%s690] ss:$2 sm:$0xff] %v670
      %v692 = vld.sshfl [vmem:[#allocation1] sm:$0xff pattern:$0x75316420]
      %v693 = vld.sshfl [vmem:[#allocation1 + $0x8] sm:$0xff pattern:$0x75316420]
      %v694 = vld.sshfl [vmem:[#allocation1 + $0x10] sm:$0xff pattern:$0x75316420]
      %695 = vrot.lane.b32.xlu0 %v692, 113
      %v696 = vpop.permute.xlu0 %695
      %697 = vrot.lane.b32.xlu0 %v693, 113
      %v698 = vpop.permute.xlu0 %697
      %699 = vrot.lane.b32.xlu0 %v694, 113
      %v700 = vpop.permute.xlu0 %699
      %v701 = vsel %vm312, %v696, %v698
      %v702 = vsel %vm312, %v698, %v700
      %v705 = vsel %vm253, %v685, %v701
      %v706 = vsel %vm254, %v686, %v702
      %707 = vst [vmem:[#allocation1] ss:$2 sm:$0xff] %v669
      %s708 = scalar_lea.vmem [#allocation1], 16
      %709 = vst [vmem:[%s708] ss:$2 sm:$0xff] %v670
      %v710 = vld.sshfl [vmem:[#allocation1] sm:$0xff pattern:$0x75316420]
      %v711 = vld.sshfl [vmem:[#allocation1 + $0x8] sm:$0xff pattern:$0x75316420]
      %v712 = vld.sshfl [vmem:[#allocation1 + $0x10] sm:$0xff pattern:$0x75316420]
      %713 = vrot.lane.b32.xlu0 %v710, 113
      %v714 = vpop.permute.xlu0 %713
      %715 = vrot.lane.b32.xlu0 %v711, 113
      %v716 = vpop.permute.xlu0 %715
      %717 = vrot.lane.b32.xlu0 %v712, 113
      %v718 = vpop.permute.xlu0 %717
      %v719 = vsel %vm312, %v714, %v716
      %v720 = vsel %vm312, %v716, %v718
      %723 = vst [vmem:[#allocation1] ss:$2 sm:$0xff] %v669
      %s724 = scalar_lea.vmem [#allocation1], 16
      %725 = vst [vmem:[%s724] ss:$2 sm:$0xff] %v670
      %v726 = vld.sshfl [vmem:[#allocation1] sm:$0xff pattern:$0x75316420]
      %v727 = vld.sshfl [vmem:[#allocation1 + $0x8] sm:$0xff pattern:$0x75316420]
      %v728 = vld.sshfl [vmem:[#allocation1 + $0x10] sm:$0xff pattern:$0x75316420]
      %729 = vrot.lane.b32.xlu0 %v726, 111
      %v730 = vpop.permute.xlu0 %729
      %731 = vrot.lane.b32.xlu0 %v727, 111
      %v732 = vpop.permute.xlu0 %731
      %733 = vrot.lane.b32.xlu0 %v728, 111
      %v734 = vpop.permute.xlu0 %733
      %v735 = vsel %vm295, %v730, %v732
      %v736 = vsel %vm295, %v732, %v734
      %v739 = vsel %vm255, %v719, %v735
      %v740 = vsel %vm256, %v720, %v736
      %741 = vst [vmem:[#allocation3] sm:$0xf] %v705
      %742 = vst [vmem:[#allocation3 + $0x8] sm:$0xf] %v706
      %s743 = scalar_lea.vmem [#allocation1], 1
      %744 = vst [vmem:[%s743] ss:$2 sm:$0xff] %v669
      %s745 = scalar_lea.vmem [#allocation1], 17
      %746 = vst [vmem:[%s745] ss:$2 sm:$0xff] %v670
      %v747 = vld.sshfl [vmem:[#allocation1] sm:$0xff pattern:$0x75316420]
      %v748 = vld.sshfl [vmem:[#allocation1 + $0x8] sm:$0xff pattern:$0x75316420]
      %v749 = vld.sshfl [vmem:[#allocation1 + $0x10] sm:$0xff pattern:$0x75316420]
      %750 = vrot.lane.b32.xlu0 %v747, 112
      %v751 = vpop.permute.xlu0 %750
      %752 = vrot.lane.b32.xlu0 %v748, 112
      %v753 = vpop.permute.xlu0 %752
      %754 = vrot.lane.b32.xlu0 %v749, 112
      %v755 = vpop.permute.xlu0 %754
      %v756 = vsel %vm368, %v751, %v753
      %v757 = vsel %vm368, %v753, %v755
      %760 = vst [vmem:[#allocation3] sm:$0xf0] %v756
      %761 = vst [vmem:[#allocation3 + $0x8] sm:$0xf0] %v757
      %762 = vst [vmem:[#allocation3 + $0x10] sm:$0xf] %v739
      %763 = vst [vmem:[#allocation3 + $0x18] sm:$0xf] %v740
      %v764 = vld [vmem:[#allocation2] sm:$0xff]
      %v765 = vld [vmem:[#allocation2 + $0x8] sm:$0xf]
      %768 = vst [vmem:[#allocation1] ss:$2 sm:$0xff] %v764
      %s769 = scalar_lea.vmem [#allocation1], 16
      %770 = vst [vmem:[%s769] ss:$2 sm:$0xff] %v765
      %v771 = vld.sshfl [vmem:[#allocation1] sm:$0xff pattern:$0x75316420]
      %v772 = vld.sshfl [vmem:[#allocation1 + $0x8] sm:$0xff pattern:$0x75316420]
      %v773 = vld.sshfl [vmem:[#allocation1 + $0x10] sm:$0xff pattern:$0x75316420]
      %774 = vrot.lane.b32.xlu0 %v771, 95
      %v775 = vpop.permute.xlu0 %774
      %776 = vrot.lane.b32.xlu0 %v772, 95
      %v777 = vpop.permute.xlu0 %776
      %778 = vrot.lane.b32.xlu0 %v773, 95
      %v779 = vpop.permute.xlu0 %778
      %v780 = vsel %vm393, %v775, %v777
      %v781 = vsel %vm393, %v777, %v779
      %784 = vst [vmem:[#allocation1] ss:$2 sm:$0xff] %v764
      %s785 = scalar_lea.vmem [#allocation1], 16
      %786 = vst [vmem:[%s785] ss:$2 sm:$0xff] %v765
      %v787 = vld.sshfl [vmem:[#allocation1] sm:$0xff pattern:$0x75316420]
      %v788 = vld.sshfl [vmem:[#allocation1 + $0x8] sm:$0xff pattern:$0x75316420]
      %v789 = vld.sshfl [vmem:[#allocation1 + $0x10] sm:$0xff pattern:$0x75316420]
      %790 = vrot.lane.b32.xlu0 %v787, 97
      %v791 = vpop.permute.xlu0 %790
      %792 = vrot.lane.b32.xlu0 %v788, 97
      %v793 = vpop.permute.xlu0 %792
      %794 = vrot.lane.b32.xlu0 %v789, 97
      %v795 = vpop.permute.xlu0 %794
      %v796 = vsel %vm410, %v791, %v793
      %v797 = vsel %vm410, %v793, %v795
      %v800 = vsel %vm253, %v780, %v796
      %v801 = vsel %vm254, %v781, %v797
      %802 = vst [vmem:[#allocation1] ss:$2 sm:$0xff] %v764
      %s803 = scalar_lea.vmem [#allocation1], 16
      %804 = vst [vmem:[%s803] ss:$2 sm:$0xff] %v765
      %v805 = vld.sshfl [vmem:[#allocation1] sm:$0xff pattern:$0x75316420]
      %v806 = vld.sshfl [vmem:[#allocation1 + $0x8] sm:$0xff pattern:$0x75316420]
      %v807 = vld.sshfl [vmem:[#allocation1 + $0x10] sm:$0xff pattern:$0x75316420]
      %808 = vrot.lane.b32.xlu0 %v805, 97
      %v809 = vpop.permute.xlu0 %808
      %810 = vrot.lane.b32.xlu0 %v806, 97
      %v811 = vpop.permute.xlu0 %810
      %812 = vrot.lane.b32.xlu0 %v807, 97
      %v813 = vpop.permute.xlu0 %812
      %v814 = vsel %vm410, %v809, %v811
      %v815 = vsel %vm410, %v811, %v813
      %818 = vst [vmem:[#allocation1] ss:$2 sm:$0xff] %v764
      %s819 = scalar_lea.vmem [#allocation1], 16
      %820 = vst [vmem:[%s819] ss:$2 sm:$0xff] %v765
      %v821 = vld.sshfl [vmem:[#allocation1] sm:$0xff pattern:$0x75316420]
      %v822 = vld.sshfl [vmem:[#allocation1 + $0x8] sm:$0xff pattern:$0x75316420]
      %v823 = vld.sshfl [vmem:[#allocation1 + $0x10] sm:$0xff pattern:$0x75316420]
      %824 = vrot.lane.b32.xlu0 %v821, 95
      %v825 = vpop.permute.xlu0 %824
      %826 = vrot.lane.b32.xlu0 %v822, 95
      %v827 = vpop.permute.xlu0 %826
      %828 = vrot.lane.b32.xlu0 %v823, 95
      %v829 = vpop.permute.xlu0 %828
      %v830 = vsel %vm393, %v825, %v827
      %v831 = vsel %vm393, %v827, %v829
      %v834 = vsel %vm255, %v814, %v830
      %v835 = vsel %vm256, %v815, %v831
      %v838 = vrot.slane %v800, 4
      %v839 = vrot.slane %v801, 4
      %842 = vst [vmem:[#allocation3 + $0x10] sm:$0xf0] %v838
      %843 = vst [vmem:[#allocation3 + $0x18] sm:$0xf0] %v839
      %844 = vst [vmem:[#allocation1] ss:$2 sm:$0xff] %v764
      %s845 = scalar_lea.vmem [#allocation1], 16
      %846 = vst [vmem:[%s845] ss:$2 sm:$0xff] %v765
      %v847 = vld.sshfl [vmem:[#allocation1] sm:$0xff pattern:$0x75316420]
      %v848 = vld.sshfl [vmem:[#allocation1 + $0x8] sm:$0xff pattern:$0x75316420]
      %v849 = vld.sshfl [vmem:[#allocation1 + $0x10] sm:$0xff pattern:$0x75316420]
      %850 = vrot.lane.b32.xlu0 %v847, 96
      %v851 = vpop.permute.xlu0 %850
      %852 = vrot.lane.b32.xlu0 %v848, 96
      %v853 = vpop.permute.xlu0 %852
      %854 = vrot.lane.b32.xlu0 %v849, 96
      %v855 = vpop.permute.xlu0 %854
      %v856 = vsel %vm471, %v851, %v853
      %v857 = vsel %vm471, %v853, %v855
      %860 = vst [vmem:[#allocation3 + $0x20] sm:$0xf] %v856
      %861 = vst [vmem:[#allocation3 + $0x28] sm:$0xf] %v857
      %v864 = vrot.slane %v834, 4
      %v865 = vrot.slane %v835, 4
      %868 = vst [vmem:[#allocation3 + $0x20] sm:$0xf0] %v864
      %869 = vst [vmem:[#allocation3 + $0x28] sm:$0xf0] %v865
      %v870 = vld [vmem:[#allocation2] sm:$0xff]
      %v871 = vld [vmem:[#allocation2 + $0x8] sm:$0xf]
      %874 = vst [vmem:[#allocation1] ss:$2 sm:$0xff] %v870
      %s875 = scalar_lea.vmem [#allocation1], 16
      %876 = vst [vmem:[%s875] ss:$2 sm:$0xff] %v871
      %v877 = vld.sshfl [vmem:[#allocation1] sm:$0xff pattern:$0x75316420]
      %v878 = vld.sshfl [vmem:[#allocation1 + $0x8] sm:$0xff pattern:$0x75316420]
      %v879 = vld.sshfl [vmem:[#allocation1 + $0x10] sm:$0xff pattern:$0x75316420]
      %880 = vrot.lane.b32.xlu0 %v877, 79
      %v881 = vpop.permute.xlu0 %880
      %882 = vrot.lane.b32.xlu0 %v878, 79
      %v883 = vpop.permute.xlu0 %882
      %884 = vrot.lane.b32.xlu0 %v879, 79
      %v885 = vpop.permute.xlu0 %884
      %v886 = vsel %vm502, %v881, %v883
      %v887 = vsel %vm502, %v883, %v885
      %890 = vst [vmem:[#allocation1] ss:$2 sm:$0xff] %v870
      %s891 = scalar_lea.vmem [#allocation1], 16
      %892 = vst [vmem:[%s891] ss:$2 sm:$0xff] %v871
      %v893 = vld.sshfl [vmem:[#allocation1] sm:$0xff pattern:$0x75316420]
      %v894 = vld.sshfl [vmem:[#allocation1 + $0x8] sm:$0xff pattern:$0x75316420]
      %v895 = vld.sshfl [vmem:[#allocation1 + $0x10] sm:$0xff pattern:$0x75316420]
      %896 = vrot.lane.b32.xlu0 %v893, 81
      %v897 = vpop.permute.xlu0 %896
      %898 = vrot.lane.b32.xlu0 %v894, 81
      %v899 = vpop.permute.xlu0 %898
      %900 = vrot.lane.b32.xlu0 %v895, 81
      %v901 = vpop.permute.xlu0 %900
      %v902 = vsel %vm519, %v897, %v899
      %v903 = vsel %vm519, %v899, %v901
      %v906 = vsel %vm253, %v886, %v902
      %v907 = vsel %vm254, %v887, %v903
      %908 = vst [vmem:[#allocation1] ss:$2 sm:$0xff] %v870
      %s909 = scalar_lea.vmem [#allocation1], 16
      %910 = vst [vmem:[%s909] ss:$2 sm:$0xff] %v871
      %v911 = vld.sshfl [vmem:[#allocation1] sm:$0xff pattern:$0x75316420]
      %v912 = vld.sshfl [vmem:[#allocation1 + $0x8] sm:$0xff pattern:$0x75316420]
      %v913 = vld.sshfl [vmem:[#allocation1 + $0x10] sm:$0xff pattern:$0x75316420]
      %914 = vrot.lane.b32.xlu0 %v911, 81
      %v915 = vpop.permute.xlu0 %914
      %916 = vrot.lane.b32.xlu0 %v912, 81
      %v917 = vpop.permute.xlu0 %916
      %918 = vrot.lane.b32.xlu0 %v913, 81
      %v919 = vpop.permute.xlu0 %918
      %v920 = vsel %vm519, %v915, %v917
      %v921 = vsel %vm519, %v917, %v919
      %924 = vst [vmem:[#allocation1] ss:$2 sm:$0xff] %v870
      %s925 = scalar_lea.vmem [#allocation1], 16
      %926 = vst [vmem:[%s925] ss:$2 sm:$0xff] %v871
      %v927 = vld.sshfl [vmem:[#allocation1] sm:$0xff pattern:$0x75316420]
      %v928 = vld.sshfl [vmem:[#allocation1 + $0x8] sm:$0xff pattern:$0x75316420]
      %v929 = vld.sshfl [vmem:[#allocation1 + $0x10] sm:$0xff pattern:$0x75316420]
      %930 = vrot.lane.b32.xlu0 %v927, 79
      %v931 = vpop.permute.xlu0 %930
      %932 = vrot.lane.b32.xlu0 %v928, 79
      %v933 = vpop.permute.xlu0 %932
      %934 = vrot.lane.b32.xlu0 %v929, 79
      %v935 = vpop.permute.xlu0 %934
      %v936 = vsel %vm502, %v931, %v933
      %v937 = vsel %vm502, %v933, %v935
      %v940 = vsel %vm255, %v920, %v936
      %v941 = vsel %vm256, %v921, %v937
      %942 = vst [vmem:[#allocation3 + $0x30] sm:$0xf] %v906
      %943 = vst [vmem:[#allocation3 + $0x38] sm:$0xf] %v907
      %s944 = scalar_lea.vmem [#allocation1], 1
      %945 = vst [vmem:[%s944] ss:$2 sm:$0xff] %v870
      %s946 = scalar_lea.vmem [#allocation1], 17
      %947 = vst [vmem:[%s946] ss:$2 sm:$0xff] %v871
      %v948 = vld.sshfl [vmem:[#allocation1] sm:$0xff pattern:$0x75316420]
      %v949 = vld.sshfl [vmem:[#allocation1 + $0x8] sm:$0xff pattern:$0x75316420]
      %v950 = vld.sshfl [vmem:[#allocation1 + $0x10] sm:$0xff pattern:$0x75316420]
      %951 = vrot.lane.b32.xlu0 %v948, 80
      %v952 = vpop.permute.xlu0 %951
      %953 = vrot.lane.b32.xlu0 %v949, 80
      %v954 = vpop.permute.xlu0 %953
      %955 = vrot.lane.b32.xlu0 %v950, 80
      %v956 = vpop.permute.xlu0 %955
      %v957 = vsel %vm575, %v952, %v954
      %v958 = vsel %vm575, %v954, %v956
      %961 = vst [vmem:[#allocation3 + $0x30] sm:$0xf0] %v957
      %962 = vst [vmem:[#allocation3 + $0x38] sm:$0xf0] %v958
      %963 = vst [vmem:[#allocation3 + $0x40] sm:$0xf] %v940
      %964 = vst [vmem:[#allocation3 + $0x48] sm:$0xf] %v941
      %v965 = vld [vmem:[%s3] sm:$0xf]
      %v966 = vld [vmem:[#allocation3] sm:$0xff]
      %v967 = vld [vmem:[#allocation3 + $0x8] sm:$0xff]
      %v968 = vld [vmem:[#allocation3 + $0x10] sm:$0xff]
      %v969 = vld [vmem:[#allocation3 + $0x18] sm:$0xff]
      %v970 = vld [vmem:[#allocation3 + $0x20] sm:$0xff]
      %v971 = vld [vmem:[#allocation3 + $0x28] sm:$0xff]
      %v972 = vld [vmem:[#allocation3 + $0x30] sm:$0xff]
      %v973 = vld [vmem:[#allocation3 + $0x38] sm:$0xff]
      %v974 = vld [vmem:[#allocation3 + $0x40] sm:$0xf]
      %v975 = vld [vmem:[#allocation3 + $0x48] sm:$0xf]
      %v976 = vld [vmem:[%s4] sm:$0xf]
      %978 = vset.pattern.permute.xlu0 0
      %979 = vperm.xlu0 %978, %v976
      %v980 = vpop.permute.xlu0 %979
      %v983 = vsel %vm601, %v965, 0
      %v986 = vsel %vm605, %v974, 0
      %v989 = vsel %vm605, %v975, 0
      %991 = vmatpush.msra.mxu0 0.0
      %992 = vmatpush.msra.mxu0 0.0
      %993 = vmatpush.msra.mxu0 0.0
      %994 = vmatpush.msra.mxu0 0.0
      %995 = vmatpush.msra.mxu0 0.0
      %996 = vmatpush.msra.mxu0 0.0
      %997 = vmatpush.msra.mxu0 0.0
      %998 = vmatpush.msra.mxu0 0.0
      %999 = vmatpush.msra.mxu0 0.0
      %1000 = vmatpush.msra.mxu0 0.0
      %1001 = vmatpush.msra.mxu0 0.0
      %1002 = vmatpush.msra.mxu0 %v986
      %1003 = vmatpush.msra.mxu0 %v972
      %1004 = vmatpush.msra.mxu0 %v970
      %1005 = vmatpush.msra.mxu0 %v968
      %1006 = vmatpush.msra.mxu0 %v966
      %1007 = vmatmul.f32.gmra.mxu0 %v983
      %v1008 = vpop.f32.mrf.mxu0
      %v1009 = vadd.f32 %v980, %v1008
      %1010 = vdwg.mxu0
      %1011 = vmatpush.msra.mxu0 0.0
      %1012 = vmatpush.msra.mxu0 0.0
      %1013 = vmatpush.msra.mxu0 0.0
      %1014 = vmatpush.msra.mxu0 0.0
      %1015 = vmatpush.msra.mxu0 0.0
      %1016 = vmatpush.msra.mxu0 0.0
      %1017 = vmatpush.msra.mxu0 0.0
      %1018 = vmatpush.msra.mxu0 0.0
      %1019 = vmatpush.msra.mxu0 0.0
      %1020 = vmatpush.msra.mxu0 0.0
      %1021 = vmatpush.msra.mxu0 0.0
      %1022 = vmatpush.msra.mxu0 %v989
      %1023 = vmatpush.msra.mxu0 %v973
      %1024 = vmatpush.msra.mxu0 %v971
      %1025 = vmatpush.msra.mxu0 %v969
      %1026 = vmatpush.msra.mxu0 %v967
      %1027 = vmatmul.f32.gmra.mxu0 %v983
      %v1028 = vpop.f32.mrf.mxu0
      %v1029 = vadd.f32 %v980, %v1028
      %1030 = vdwg.mxu0
      %v1033 = vrot.slane %v1029, 4
      %v1034 = vsel %vm605, %v1009, %v1033
      %v1036 = vadd.f32 %v225, %v1034
      %1037 = vst [vmem:[%s224] sm:$0xff] %v1036
      %p1038 = scmp.lt.s32.totalorder %s16, 1
      %s1039 = scalar_select %p1038, %s16, 1
      %s1040 = smul.addr %s1039, 2
      %s1041 = smul.addr %s1040, 4
      %s1042 = scalar_lea.vmem %s5, %s1041
      // Predicated region
      $region41: #{resnet_block_forward.1} parent=39 // pred_check
        %p1043 = pneg %p144
      $region42: #{resnet_block_forward.1} parent=39 // pred_check_branch
        %1045 = sbr.rel (%p1043) target = $region44
      $region43: #{resnet_block_forward.1} parent=39 // pred_region
        _
      $region44: #{resnet_block_forward.1} parent=39 // pred_fallthru
        _
    $region40: #{resnet_block_forward.1} parent=5 // pred_fallthru
      _
    %p1046 = scmp.le.s32.totalorder 2, %s11
    // Predicated region
    $region45: #{resnet_block_forward.1} parent=5 // pred_check
      %p1047 = pneg %p1046
    $region46: #{resnet_block_forward.1} parent=5 // pred_check_branch
      %1049 = sbr.rel (%p1047) target = $region48
    $region47: #{resnet_block_forward.1} parent=5 // pred_region
      %s1050 = ssub.s32 %s11, 2
      // Predicated region
      $region49: #{resnet_block_forward.1} parent=47 // pred_check
        %p1051 = pneg %p150
      $region50: #{resnet_block_forward.1} parent=47 // pred_check_branch
        %1053 = sbr.rel (%p1051) target = $region52
      $region51: #{resnet_block_forward.1} parent=47 // pred_region
        %p1054 = scmp.lt.s32.totalorder %s17, 1
        %s1055 = scalar_select %p1054, %s17, 1
        %s1056 = smul.addr %s1055, 2
        %s1057 = smul.addr %s1056, 4
        %s1058 = scalar_lea.vmem %s5, %s1057
      $region52: #{resnet_block_forward.1} parent=47 // pred_fallthru
        _
    $region48: #{resnet_block_forward.1} parent=5 // pred_fallthru
      _
  $region6: #{resnet_block_forward.1} parent=0 // loop_footer
    %s15 = sadd.s32 1, %s11
  $region7: #{resnet_block_forward.1} parent=0 // loop_footer_branch
    %10 = sbr.rel target = $region3
  $region8: #{resnet_block_forward.1} parent=0 // loop_exit
    _

</llo_original>
